<compile_context>
chip_gen: v5e
topology: v5e:2x2
jax: 0.10.0
libtpu: 0.0.40
codegen_flags: <defaults>
</compile_context>

<pallas_src>
import jax
import jax.numpy as jnp
from jax.experimental import pallas as pl
from jax.experimental.pallas import tpu as pltpu


def _sine_kernel(w0_ref, x_ref, o_ref):
    # w0 is a (1, 1) f32 scalar in SMEM; x_ref / o_ref are lane-dense VMEM tiles.
    w0 = w0_ref[0, 0]
    # Compute in f32 regardless of storage dtype: sin(5*x) in bf16 loses
    # accuracy to range reduction, and v5e has no bf16 VPU/EUP path anyway.
    x = x_ref[...].astype(jnp.float32)
    o_ref[...] = jnp.sin(w0 * x).astype(o_ref.dtype)
    # TODO(synk): at real PINN layer sizes the decisive optimization lives
    # outside this file: fuse sin(w0*x) into the producing matmul's epilogue
    # (removes a full HBM pass and hides the sin VALU work under MXU cycles,
    # which matters most on v7x / bf16 where this standalone pass is close to
    # flipping from HBM-bound to VALU-bound).


def sine_forward(x: jax.Array, w0, *, alias_input: bool = False) -> jax.Array:
    """y = sin(w0 * x), elementwise, via a tiled, pipelined Pallas TPU kernel.

    alias_input=True adds input_output_aliases so the output reuses x's HBM
    buffer (most effective when the caller also donates x at a jit boundary,
    e.g. jit(..., donate_argnums=0)); it is only applied when the flattened
    size is lane-aligned so no pad copy is involved.
    """
    orig_shape = x.shape
    orig_dtype = x.dtype
    n = x.size

    itemsize = jnp.dtype(orig_dtype).itemsize
    # Minimum sublane multiple for the dtype's packed tile: f32->8, bf16->16, int8->32.
    sub = max(8, 32 // itemsize)

    # ---- lane width ---------------------------------------------------------
    # Prefer a lane width (multiple of 128) that divides n exactly: the 2-D
    # slab is then a pure reshape (no wrapper-side pad/slice HBM round trips)
    # and the output is alias-eligible.
    lanes = None
    for cand in (2048, 1024, 512, 256, 128):
        if n % cand == 0 and (n // cand >= sub or cand == 128):
            lanes = cand
            break
    pad = 0
    if lanes is None:
        # Lane-ragged size: pad only up to the next multiple of the lane width.
        # (The row dimension is handled raggedly by the pipeline, see below.)
        # TODO(synk): handle lane-ragged tails with in-kernel masked stores so
        # this residual wrapper-side pad/slice round trip also disappears.
        lanes = 128
        for cand in (2048, 1024, 512, 256):
            if n >= cand * sub * 4:
                lanes = cand
                break
        pad = (-n) % lanes

    rows = (n + pad) // lanes

    # ---- row tiling ---------------------------------------------------------
    # ~2 MiB input tiles: past the measured HBM-roofline knee (~85% at 1 MiB)
    # and further amortizes the ~0.35 us/grid-step overhead, at tiny VMEM cost.
    tile_bytes = 2 << 20
    rows_r = pl.cdiv(rows, sub) * sub                                  # sub-rounded rows
    tr_cap = max(sub, (tile_bytes // (lanes * itemsize)) // sub * sub)
    nt = pl.cdiv(rows_r, tr_cap)
    if rows_r >= 2 * sub:
        nt = max(nt, 2)            # >= 2 tiles so both v7x TensorCores get work
    if nt > 1 and nt % 2:
        nt += 1                    # prefer an even tile count (TC balance); best effort
    tr = max(sub, pl.cdiv(pl.cdiv(rows_r, nt), sub) * sub)
    if rows < sub:
        tr = rows                  # tiny input: a single full-array block is always legal
    grid_rows = pl.cdiv(rows, tr)
    # NOTE: rows need not be a multiple of tr.  Pallas pads the last partial
    # input block (garbage past the end -- harmless for sin) and drops the
    # out-of-bounds part of the last output block, so no wrapper-side padding
    # of the row dimension is needed.

    x_flat = x.reshape(-1)
    if pad:
        x_flat = jnp.pad(x_flat, (0, pad))
    x2d = x_flat.reshape(rows, lanes)

    # Scalar parameter lives in SMEM as f32 (accurate math path on all chips).
    w0_smem = jnp.asarray(w0, dtype=jnp.float32).reshape(1, 1)

    extra_kwargs = {}
    if alias_input and pad == 0:
        extra_kwargs["input_output_aliases"] = {1: 0}   # x2d -> out2d (in-place)

    out2d = pl.pallas_call(
        _sine_kernel,
        out_shape=jax.ShapeDtypeStruct((rows, lanes), orig_dtype),
        grid_spec=pl.GridSpec(
            grid=(grid_rows,),
            in_specs=[
                pl.BlockSpec(memory_space=pltpu.SMEM),           # w0 scalar
                pl.BlockSpec((tr, lanes), lambda i: (i, 0)),     # x row-tile
            ],
            out_specs=pl.BlockSpec((tr, lanes), lambda i: (i, 0)),
        ),
        compiler_params=pltpu.CompilerParams(
            dimension_semantics=("parallel",),       # shard row tiles across v7x's 2 TCs
            vmem_limit_bytes=32 * 1024 * 1024,       # 2x(in+out) 2 MiB tiles + f32 temps;
                                                     # within all chips' physical VMEM
        ),
        cost_estimate=pl.CostEstimate(
            flops=n,                                  # one mul per element
            transcendentals=n,                        # one sin per element
            bytes_accessed=2 * n * itemsize,          # read x + write y
        ),
        **extra_kwargs,
    )(w0_smem, x2d)

    y = out2d.reshape(-1)
    if pad:
        y = y[:n]
    return y.reshape(orig_shape)


if __name__ == "__main__":
    key = jax.random.PRNGKey(0)
    # Small input consistent with a PINN activation call (NCHW-like tensor).
    x = jax.random.normal(key, (2, 4, 16, 16), dtype=jnp.float32)

    # Deterministic parameter init, matching nn.Parameter(torch.tensor(5.0)).
    w0 = jnp.float32(5.0)

    ref = jnp.sin(w0 * x)

    # 1) Default (lane-aligned, pad-free) path.
    y = jax.block_until_ready(sine_forward(x, w0))
    assert y.shape == x.shape and y.dtype == x.dtype
    assert jnp.allclose(y, ref, atol=1e-6, rtol=1e-6)

    # 2) In-place variant (input_output_aliases); in production also donate x
    #    at the jit boundary so the output truly reuses x's HBM buffer.
    y_alias = jax.block_until_ready(
        jax.jit(lambda xx: sine_forward(xx, w0, alias_input=True))(x)
    )
    assert jnp.allclose(y_alias, ref, atol=1e-6, rtol=1e-6)

    # 3) Ragged (non-128-aligned) size exercises the partial-tail handling.
    x2 = jax.random.normal(jax.random.PRNGKey(1), (3, 5, 7), dtype=jnp.float32)
    y2 = jax.block_until_ready(sine_forward(x2, w0))
    assert y2.shape == x2.shape and y2.dtype == x2.dtype
    assert jnp.allclose(y2, jnp.sin(w0 * x2), atol=1e-6, rtol=1e-6)

    print("KERNEL_OK")
</pallas_src>

<mosaic_0001>
module attributes {stable_mosaic.version = 11 : i64} {
  func.func @_sine_kernel(%arg0: i32, %arg1: memref<1x1xf32, #tpu.memory_space<smem>>, %arg2: memref<8x256xf32, #tpu.memory_space<vmem>>, %arg3: memref<8x256xf32, #tpu.memory_space<vmem>>) attributes {dimension_semantics = [#tpu.dimension_semantics<parallel>], iteration_bounds = array<i64: 1>, scalar_prefetch = 0 : i64, scratch_operands = 0 : i64, tpu.core_type = #tpu.core_type<tc>, window_params = [{transform_indices = @transform_0, window_bounds = array<i64: 1, 1>}, {transform_indices = @transform_1, window_bounds = array<i64: 8, 256>}, {transform_indices = @transform_2, window_bounds = array<i64: 8, 256>}]} {
    %c0 = arith.constant 0 : index
    %c0_0 = arith.constant 0 : index
    %0 = memref.load %arg1[%c0, %c0_0] : memref<1x1xf32, #tpu.memory_space<smem>>
    %c0_1 = arith.constant 0 : index
    %c0_2 = arith.constant 0 : index
    %1 = vector.load %arg2[%c0_1, %c0_2] : memref<8x256xf32, #tpu.memory_space<vmem>>, vector<8x256xf32>
    %2 = vector.broadcast %0 : f32 to vector<8x256xf32>
    %3 = arith.mulf %2, %1 : vector<8x256xf32>
    %4 = math.sin %3 : vector<8x256xf32>
    %c0_3 = arith.constant 0 : index
    %c0_4 = arith.constant 0 : index
    %5 = vector.load %arg3[%c0_3, %c0_4] : memref<8x256xf32, #tpu.memory_space<vmem>>, vector<8x256xf32>
    tpu.vector_store %arg3[%c0_3, %c0_4], %4 {strides = array<i32>} : memref<8x256xf32, #tpu.memory_space<vmem>>, vector<8x256xf32>,
    return
  }
  func.func @transform_0(%arg0: i32) -> (i32, i32) {
    %c0_i32 = arith.constant 0 : i32
    %c0_i32_0 = arith.constant 0 : i32
    %c0_i32_1 = arith.constant 0 : i32
    return %c0_i32, %c0_i32_0 : i32, i32
  }
  func.func @transform_1(%arg0: i32) -> (i32, i32) {
    %c0_i32 = arith.constant 0 : i32
    %c0_i32_0 = arith.constant 0 : i32
    return %arg0, %c0_i32 : i32, i32
  }
  func.func @transform_2(%arg0: i32) -> (i32, i32) {
    %c0_i32 = arith.constant 0 : i32
    %c0_i32_0 = arith.constant 0 : i32
    return %arg0, %c0_i32 : i32, i32
  }
}

</mosaic_0001>

<llo_original>
// kernel: tpu_custom_call.1
$region0: #{tpu_custom_call.1}
  #allocation0 [shape = 'u32[]', space=smem, size = 0x4, offset = 0x4, fixed_abs, tag = 'smem constant byte address 0x4 - core index']
  #allocation1 [shape = 'u32[72,128]{1,0:T(1,128)}', space=vmem, size = 0x9000, scoped, tag = 'internal scratch']
  #allocation2 [shape = 'f32[1,1]{1,0:T(1,128)S(6)}', space=smem, size = 0x200, scoped, tag = 'scoped memory for tpu_custom_call.1']
  %s0 = inlined_call_operand.<no memory space> [shape: f32[1,1], index: 0, kind: input, shape index: {}]
  %s1 = inlined_call_operand.hbm [shape: f32[8,256], index: 1, kind: input, shape index: {}]
  %s2 = inlined_call_operand.hbm [shape: f32[8,256], index: 2, kind: output, shape index: {}]
  %s3 = sld [smem:[#allocation0]]
  $region22: #{tpu_custom_call.1} parent=0
    _
  %s5 = ssub.s32 1, %s3
  %s6 = scalar_select 0, %s5, %s3
  %7 = sst [smem:[#allocation2]] %s0
  $region1: #{tpu_custom_call.1} parent=0
    #allocation3 [shape = 'u8[8192]{0}', space=vmem, size = 0x2000, scoped, tag = 'input window, operand 1, single buffered']
    #allocation4 [shape = 's32[1]{0}', space=sflag, size = 0x4, scoped, tag = 'scoped memory for tpu_custom_call.1']
    #allocation5 [shape = 's32[1]{0}', space=sflag, size = 0x4, scoped, tag = 'scoped memory for tpu_custom_call.1']
    #allocation6 [shape = 'u8[8192]{0}', space=vmem, size = 0x2000, scoped, tag = 'output window, operand 0, single buffered']
    %8 = vsyncpa [#allocation4], 0
    %9 = vsyncpa [#allocation5], 0
    // Predicated region
    $region2: #{tpu_custom_call.1} parent=1 // pred_check
      _
    $region3: #{tpu_custom_call.1} parent=1 // pred_check_branch
      %11 = sbr.rel (0) target = $region5
    $region4: #{tpu_custom_call.1} parent=1 // pred_region
      _
    $region5: #{tpu_custom_call.1} parent=1 // pred_fallthru
      _
    // Predicated region
    $region6: #{tpu_custom_call.1} parent=1 // pred_check
      _
    $region7: #{tpu_custom_call.1} parent=1 // pred_check_branch
      %13 = sbr.rel (0) target = $region9
    $region8: #{tpu_custom_call.1} parent=1 // pred_region
      %15 = vsyncadd [#allocation4], 0
      %s17 = sshll.u32 %s1, 4
      %s18 = int_to_ptr.hbm [resolvable:$true] %s17
      %s19 = sshll.u32 [#allocation3], 4
      %s20 = int_to_ptr.vmem [resolvable:$true] %s19
      %22 = dma.hbm_to_vmem [thread:$0]  %s18, 256, %s20, [#allocation4]
    $region9: #{tpu_custom_call.1} parent=1 // pred_fallthru
      _
    // Predicated region
    $region10: #{tpu_custom_call.1} parent=1 // pred_check
      _
    $region11: #{tpu_custom_call.1} parent=1 // pred_check_branch
      %24 = sbr.rel (0) target = $region13
    $region12: #{tpu_custom_call.1} parent=1 // pred_region
      %26 = dma.done [#allocation4], 256
    $region13: #{tpu_custom_call.1} parent=1 // pred_fallthru
      _
    %s27 = sld [smem:[#allocation2]]
    %v28 = vld [vmem:[#allocation3] sm:$0xff]
    %v29 = vld [vmem:[#allocation3 + $0x8] sm:$0xff]
    %v30 = vstv %s27
    %v31 = vmul.f32 %v30, %v28
    %v32 = vmul.f32 %v30, %v29
    %v33 = vand.u32 2147483647, %v31
    %vm34 = vcmp.le.f32.partialorder %v33, 0.7853982
    %vm35 = vcmp.lt.s32.totalorder %v31, 0
    %v36 = vand.u32 %v31, 2139095040
    %v37 = vshrl.u32 %v36, 23
    %v38 = vsub.s32 %v37, 127
    %v39 = vand.u32 2147483647, %v31
    %v40 = vand.u32 %v39, 8388607
    %v41 = vor.u32 %v40, 8388608
    %v42 = vsub.s32 0, %v41
    %v43 = vadd.s32 %v38, 1
    %vm44 = vcmp.gt.s32.totalorder %v43, 0
    %v45 = vsel %vm44, %v43, 0
    %v46 = vshrl.u32 %v45, 5
    %v47 = vand.u32 %v45, 31
    %v48 = vsub.s32 32, %v47
    %v49 = vshrl.u32 683565275, %v48
    %v50 = vshll.u32 683565275, %v47
    %v51 = vshrl.u32 2475754826, %v48
    %v52 = vor.u32 %v50, %v51
    %v53 = vshll.u32 2475754826, %v47
    %v54 = vshrl.u32 2131351028, %v48
    %v55 = vor.u32 %v53, %v54
    %v56 = vshll.u32 2131351028, %v47
    %v57 = vshrl.u32 2102212464, %v48
    %v58 = vor.u32 %v56, %v57
    %v59 = vshll.u32 2102212464, %v47
    %v60 = vshrl.u32 920167782, %v48
    %v61 = vor.u32 %v59, %v60
    %v62 = vshll.u32 920167782, %v47
    %v63 = vshrl.u32 1326507024, %v48
    %v64 = vor.u32 %v62, %v63
    %vm65 = vcmp.lt.s32.totalorder %v46, 1
    %vm66 = vcmp.lt.s32.totalorder %v46, 2
    %vm67 = vcmp.lt.s32.totalorder %v46, 3
    %vm68 = vcmp.lt.s32.totalorder %v46, 4
    %v69 = vsel %vm65, %v49, %v52
    %v70 = vsel %vm68, %v58, 2102212464
    %v71 = vsel %vm67, %v55, %v70
    %v72 = vsel %vm66, %v69, %v71
    %v73 = vsel %vm65, %v52, %v55
    %v74 = vsel %vm68, %v61, 920167782
    %v75 = vsel %vm67, %v58, %v74
    %v76 = vsel %vm66, %v73, %v75
    %v77 = vsel %vm65, %v55, %v58
    %v78 = vsel %vm68, %v64, 1326507024
    %v79 = vsel %vm67, %v61, %v78
    %v80 = vsel %vm66, %v77, %v79
    %v81 = vshll.u32 %v41, 8
    %v82 = vand.u32 %v81, 65535
    %v83 = vshrl.u32 %v81, 16
    %v84 = vand.u32 %v80, 65535
    %v85 = vshrl.u32 %v80, 16
    %v86 = vmul.u32 %v82, %v84
    %v87 = vmul.u32 %v82, %v85
    %v88 = vmul.u32 %v83, %v84
    %v89 = vmul.u32 %v83, %v85
    %v90 = vshll.u32 %v87, 16
    %v91 = vshrl.u32 %v87, 16
    %v92 = vshll.u32 %v88, 16
    %v93 = vshrl.u32 %v88, 16
    %vm94 = vc.u32 %v86, %v90
    %v95 = vsel %vm94, 1, 0
    %v96 = vadd.s32 %v86, %v90
    %v97 = vadd.s32 %v89, %v95
    %vm98 = vc.u32 %v96, %v92
    %v99 = vsel %vm98, 1, 0
    %v100 = vadd.s32 %v96, %v92
    %v101 = vadd.s32 %v97, %v99
    %v102 = vadd.s32 %v101, %v91
    %v103 = vadd.s32 %v102, %v93
    %v104 = vand.u32 %v81, 65535
    %v105 = vshrl.u32 %v81, 16
    %v106 = vand.u32 %v76, 65535
    %v107 = vshrl.u32 %v76, 16
    %v108 = vmul.u32 %v104, %v106
    %v109 = vmul.u32 %v104, %v107
    %v110 = vmul.u32 %v105, %v106
    %v111 = vmul.u32 %v105, %v107
    %v112 = vshll.u32 %v109, 16
    %v113 = vshrl.u32 %v109, 16
    %v114 = vshll.u32 %v110, 16
    %v115 = vshrl.u32 %v110, 16
    %vm116 = vc.u32 %v108, %v112
    %v117 = vsel %vm116, 1, 0
    %v118 = vadd.s32 %v108, %v112
    %v119 = vadd.s32 %v111, %v117
    %vm120 = vc.u32 %v118, %v114
    %v121 = vsel %vm120, 1, 0
    %v122 = vadd.s32 %v118, %v114
    %v123 = vadd.s32 %v119, %v121
    %v124 = vadd.s32 %v123, %v113
    %v125 = vadd.s32 %v124, %v115
    %v126 = vmul.u32 %v81, %v72
    %v127 = vadd.s32 %v103, %v122
    %vm128 = vc.u32 %v103, %v122
    %v129 = vadd.s32 %v125, 1
    %v130 = vsel %vm128, %v129, %v125
    %v131 = vadd.s32 %v126, %v130
    %v132 = vadd.s32 %v131, 536870912
    %v133 = vshrl.u32 %v132, 30
    %v134 = vshll.u32 %v133, 30
    %v135 = vsub.s32 %v131, %v134
    %vm136 = vcmp.lt.s32.totalorder %v135, 0
    %v137 = vsub.s32 0, %v135
    %v138 = vsel %vm136, %v137, %v135
    %v139 = vclz %v138
    %v140 = vsub.s32 %v139, 2
    %vm141 = vcmp.gt.s32.totalorder 0, %v140
    %v142 = vsel %vm141, 0, %v140
    %v143 = vsub.s32 32, %v142
    %v144 = vshll.u32 %v135, %v142
    %v145 = vshrl.u32 %v127, %v143
    %v146 = vor.u32 %v144, %v145
    %v147 = vsub.s32 4294967266, %v142
    %v148 = vadd.s32 %v147, 127
    %v149 = vshll.u32 %v148, 23
    %v150 = vor.u32 4788187, %v149
    %v151 = vand.u32 2147483647, %v150
    %v153 = vcvt.s32.f32 %v146
    %v154 = vmul.f32 %v153, %v151
    %v155 = vxor.u32 %v154, 2147483648
    %v156 = vsel %vm35, %v155, %v154
    %v157 = vsub.s32 4, %v133
    %v158 = vsel %vm35, %v157, %v133
    %v159 = vsel %vm34, %v31, %v156
    %v160 = vsel %vm34, 0, %v158
    %v161 = vmul.f32 %v159, %v159
    %v162 = vmul.f32 %v161, -0.001358992
    %v163 = vadd.f32 %v162, 0.041655596
    %v164 = vmul.f32 %v161, %v163
    %v165 = vadd.f32 %v164, -0.4999988
    %v166 = vmul.f32 %v161, %v165
    %v167 = vadd.f32 1.0, %v166
    %v168 = vmul.f32 %v159, %v159
    %v169 = vmul.f32 %v168, -0.00019511016
    %v170 = vadd.f32 %v169, 0.008332121
    %v171 = vmul.f32 %v168, %v170
    %v172 = vadd.f32 %v171, -0.16666654
    %v173 = vmul.f32 %v168, %v172
    %v174 = vadd.f32 %v173, 1.0
    %v175 = vmul.f32 %v174, %v159
    %vm176 = vweird.f32 %v31
    %v177 = vadd.s32 %v160, 3
    %v178 = vand.u32 %v177, 3
    %vm179 = vcmp.lt.s32.totalorder %v178, 2
    %vm180 = vcmp.eq.s32.totalorder %v178, 0
    %v181 = vxor.u32 %v175, 2147483648
    %v182 = vsel %vm180, %v167, %v181
    %vm183 = vcmp.eq.s32.totalorder %v178, 2
    %v184 = vxor.u32 %v167, 2147483648
    %v185 = vsel %vm183, %v184, %v175
    %v186 = vsel %vm179, %v182, %v185
    %v187 = vsel %vm176, nan, %v186
    %v188 = vand.u32 2147483647, %v32
    %vm189 = vcmp.le.f32.partialorder %v188, 0.7853982
    %vm190 = vcmp.lt.s32.totalorder %v32, 0
    %v191 = vand.u32 %v32, 2139095040
    %v192 = vshrl.u32 %v191, 23
    %v193 = vsub.s32 %v192, 127
    %v194 = vand.u32 2147483647, %v32
    %v195 = vand.u32 %v194, 8388607
    %v196 = vor.u32 %v195, 8388608
    %v197 = vsub.s32 0, %v196
    %v198 = vadd.s32 %v193, 1
    %vm199 = vcmp.gt.s32.totalorder %v198, 0
    %v200 = vsel %vm199, %v198, 0
    %v201 = vshrl.u32 %v200, 5
    %v202 = vand.u32 %v200, 31
    %v203 = vsub.s32 32, %v202
    %v204 = vshrl.u32 683565275, %v203
    %v205 = vshll.u32 683565275, %v202
    %v206 = vshrl.u32 2475754826, %v203
    %v207 = vor.u32 %v205, %v206
    %v208 = vshll.u32 2475754826, %v202
    %v209 = vshrl.u32 2131351028, %v203
    %v210 = vor.u32 %v208, %v209
    %v211 = vshll.u32 2131351028, %v202
    %v212 = vshrl.u32 2102212464, %v203
    %v213 = vor.u32 %v211, %v212
    %v214 = vshll.u32 2102212464, %v202
    %v215 = vshrl.u32 920167782, %v203
    %v216 = vor.u32 %v214, %v215
    %v217 = vshll.u32 920167782, %v202
    %v218 = vshrl.u32 1326507024, %v203
    %v219 = vor.u32 %v217, %v218
    %vm220 = vcmp.lt.s32.totalorder %v201, 1
    %vm221 = vcmp.lt.s32.totalorder %v201, 2
    %vm222 = vcmp.lt.s32.totalorder %v201, 3
    %vm223 = vcmp.lt.s32.totalorder %v201, 4
    %v224 = vsel %vm220, %v204, %v207
    %v225 = vsel %vm223, %v213, 2102212464
    %v226 = vsel %vm222, %v210, %v225
    %v227 = vsel %vm221, %v224, %v226
    %v228 = vsel %vm220, %v207, %v210
    %v229 = vsel %vm223, %v216, 920167782
    %v230 = vsel %vm222, %v213, %v229
    %v231 = vsel %vm221, %v228, %v230
    %v232 = vsel %vm220, %v210, %v213
    %v233 = vsel %vm223, %v219, 1326507024
    %v234 = vsel %vm222, %v216, %v233
    %v235 = vsel %vm221, %v232, %v234
    %v236 = vshll.u32 %v196, 8
    %v237 = vand.u32 %v236, 65535
    %v238 = vshrl.u32 %v236, 16
    %v239 = vand.u32 %v235, 65535
    %v240 = vshrl.u32 %v235, 16
    %v241 = vmul.u32 %v237, %v239
    %v242 = vmul.u32 %v237, %v240
    %v243 = vmul.u32 %v238, %v239
    %v244 = vmul.u32 %v238, %v240
    %v245 = vshll.u32 %v242, 16
    %v246 = vshrl.u32 %v242, 16
    %v247 = vshll.u32 %v243, 16
    %v248 = vshrl.u32 %v243, 16
    %vm249 = vc.u32 %v241, %v245
    %v250 = vsel %vm249, 1, 0
    %v251 = vadd.s32 %v241, %v245
    %v252 = vadd.s32 %v244, %v250
    %vm253 = vc.u32 %v251, %v247
    %v254 = vsel %vm253, 1, 0
    %v255 = vadd.s32 %v251, %v247
    %v256 = vadd.s32 %v252, %v254
    %v257 = vadd.s32 %v256, %v246
    %v258 = vadd.s32 %v257, %v248
    %v259 = vand.u32 %v236, 65535
    %v260 = vshrl.u32 %v236, 16
    %v261 = vand.u32 %v231, 65535
    %v262 = vshrl.u32 %v231, 16
    %v263 = vmul.u32 %v259, %v261
    %v264 = vmul.u32 %v259, %v262
    %v265 = vmul.u32 %v260, %v261
    %v266 = vmul.u32 %v260, %v262
    %v267 = vshll.u32 %v264, 16
    %v268 = vshrl.u32 %v264, 16
    %v269 = vshll.u32 %v265, 16
    %v270 = vshrl.u32 %v265, 16
    %vm271 = vc.u32 %v263, %v267
    %v272 = vsel %vm271, 1, 0
    %v273 = vadd.s32 %v263, %v267
    %v274 = vadd.s32 %v266, %v272
    %vm275 = vc.u32 %v273, %v269
    %v276 = vsel %vm275, 1, 0
    %v277 = vadd.s32 %v273, %v269
    %v278 = vadd.s32 %v274, %v276
    %v279 = vadd.s32 %v278, %v268
    %v280 = vadd.s32 %v279, %v270
    %v281 = vmul.u32 %v236, %v227
    %v282 = vadd.s32 %v258, %v277
    %vm283 = vc.u32 %v258, %v277
    %v284 = vadd.s32 %v280, 1
    %v285 = vsel %vm283, %v284, %v280
    %v286 = vadd.s32 %v281, %v285
    %v287 = vadd.s32 %v286, 536870912
    %v288 = vshrl.u32 %v287, 30
    %v289 = vshll.u32 %v288, 30
    %v290 = vsub.s32 %v286, %v289
    %vm291 = vcmp.lt.s32.totalorder %v290, 0
    %v292 = vsub.s32 0, %v290
    %v293 = vsel %vm291, %v292, %v290
    %v294 = vclz %v293
    %v295 = vsub.s32 %v294, 2
    %vm296 = vcmp.gt.s32.totalorder 0, %v295
    %v297 = vsel %vm296, 0, %v295
    %v298 = vsub.s32 32, %v297
    %v299 = vshll.u32 %v290, %v297
    %v300 = vshrl.u32 %v282, %v298
    %v301 = vor.u32 %v299, %v300
    %v302 = vsub.s32 4294967266, %v297
    %v303 = vadd.s32 %v302, 127
    %v304 = vshll.u32 %v303, 23
    %v305 = vor.u32 4788187, %v304
    %v306 = vand.u32 2147483647, %v305
    %v308 = vcvt.s32.f32 %v301
    %v309 = vmul.f32 %v308, %v306
    %v310 = vxor.u32 %v309, 2147483648
    %v311 = vsel %vm190, %v310, %v309
    %v312 = vsub.s32 4, %v288
    %v313 = vsel %vm190, %v312, %v288
    %v314 = vsel %vm189, %v32, %v311
    %v315 = vsel %vm189, 0, %v313
    %v316 = vmul.f32 %v314, %v314
    %v317 = vmul.f32 %v316, -0.001358992
    %v318 = vadd.f32 %v317, 0.041655596
    %v319 = vmul.f32 %v316, %v318
    %v320 = vadd.f32 %v319, -0.4999988
    %v321 = vmul.f32 %v316, %v320
    %v322 = vadd.f32 1.0, %v321
    %v323 = vmul.f32 %v314, %v314
    %v324 = vmul.f32 %v323, -0.00019511016
    %v325 = vadd.f32 %v324, 0.008332121
    %v326 = vmul.f32 %v323, %v325
    %v327 = vadd.f32 %v326, -0.16666654
    %v328 = vmul.f32 %v323, %v327
    %v329 = vadd.f32 %v328, 1.0
    %v330 = vmul.f32 %v329, %v314
    %vm331 = vweird.f32 %v32
    %v332 = vadd.s32 %v315, 3
    %v333 = vand.u32 %v332, 3
    %vm334 = vcmp.lt.s32.totalorder %v333, 2
    %vm335 = vcmp.eq.s32.totalorder %v333, 0
    %v336 = vxor.u32 %v330, 2147483648
    %v337 = vsel %vm335, %v322, %v336
    %vm338 = vcmp.eq.s32.totalorder %v333, 2
    %v339 = vxor.u32 %v322, 2147483648
    %v340 = vsel %vm338, %v339, %v330
    %v341 = vsel %vm334, %v337, %v340
    %v342 = vsel %vm331, nan, %v341
    %343 = vst [vmem:[#allocation6] sm:$0xff] %v187
    %344 = vst [vmem:[#allocation6 + $0x8] sm:$0xff] %v342
    // Predicated region
    $region14: #{tpu_custom_call.1} parent=1 // pred_check
      _
    $region15: #{tpu_custom_call.1} parent=1 // pred_check_branch
      %346 = sbr.rel (0) target = $region17
    $region16: #{tpu_custom_call.1} parent=1 // pred_region
      %348 = vsyncadd [#allocation5], 0
      %s350 = sshll.u32 [#allocation6], 4
      %s351 = int_to_ptr.vmem [resolvable:$true] %s350
      %s352 = sshll.u32 %s2, 4
      %s353 = int_to_ptr.hbm [resolvable:$true] %s352
      %355 = dma.vmem_to_hbm [thread:$0]  %s351, 256, %s353, [#allocation5]
    $region17: #{tpu_custom_call.1} parent=1 // pred_fallthru
      _
    // Predicated region
    $region18: #{tpu_custom_call.1} parent=1 // pred_check
      _
    $region19: #{tpu_custom_call.1} parent=1 // pred_check_branch
      %357 = sbr.rel (0) target = $region21
    $region20: #{tpu_custom_call.1} parent=1 // pred_region
      %359 = dma.done [#allocation5], 256
    $region21: #{tpu_custom_call.1} parent=1 // pred_fallthru
      _
    %360 = vsyncpa [#allocation4], 1
    %361 = vsyncpa [#allocation5], 1

</llo_original>
